<compile_context>
chip_gen: v7x
topology: tpu7x:2x2x1
jax: 0.10.0
libtpu: 0.0.40
codegen_flags: <defaults>
</compile_context>

<pallas_src>
import jax
import jax.numpy as jnp
from jax.experimental import pallas as pl
from jax.experimental.pallas import tpu as pltpu


_LANE = 128
_SUBLANE = 8
_TILE_ELEMS = _LANE * _SUBLANE  # 1024 elements = one (8,128) f32 tile
_MAX_COLS = 8192                # lane-dense width cap


def _copy_kernel(x_ref, o_ref):
    # Whole-tile copy; memory-bound, pipelined by BlockSpec double-buffering.
    o_ref[...] = x_ref[...]


def _round_up(v, m):
    return (v + m - 1) // m * m


def _block_byte_cap():
    """Generation-aware per-block byte budget.

    ~8 MiB/block on 128 MiB-VMEM parts (v5e/v6e), ~6 MiB/block on 64 MiB-VMEM
    parts (v7x), so 2x double-buffered in+out blocks (4 buffers) stay well
    inside VMEM with headroom.
    """
    vmem = 64 * 1024 * 1024
    try:
        vmem = pltpu.get_tpu_info().vmem_capacity_bytes
    except Exception:
        pass  # TODO(synk): fall back to the conservative 64 MiB assumption.
    if vmem >= 100 * 1024 * 1024:
        return 8 * 1024 * 1024
    return 6 * 1024 * 1024


def pallas_identity(x, *, donate=False):
    """Lane-dense, tiled, pipelined Pallas copy of `x` (demo path only).

    donate=True aliases the pallas_call input into its output
    (input_output_aliases={0: 0}); only safe when the caller no longer needs
    the original buffer.  The fastest "identity" is of course no pallas_call
    at all, which the forward path already does.
    """
    total = int(x.size)
    if total == 0:
        return x

    itemsize = jnp.dtype(x.dtype).itemsize
    block_cap = _block_byte_cap()

    # Flatten and pad to a multiple of 8*128 so the 2-D view always admits
    # (multiple-of-8 rows, multiple-of-128 cols) blocks — no un-pipelined
    # whole-array fallback for odd shapes.
    padded_total = _round_up(total, _TILE_ELEMS)
    flat = x.reshape(-1)
    if padded_total != total:
        flat = jnp.pad(flat, (0, padded_total - total))

    # Widen the lane axis (biggest measured lever for lane-dense stores) while
    # divisibility permits and at least one full 8-row tile remains.
    cols = _LANE
    while (cols * 2) <= _MAX_COLS and padded_total % (cols * 2) == 0 \
            and padded_total // (cols * 2) >= _SUBLANE:
        cols *= 2
    rows = padded_total // cols

    # Row tile: as many 8-row groups as fit under the byte cap; the cdiv grid
    # handles a ragged final block, so no exact-divisor search (no collapse to
    # tiny 8-row tiles on awkward factorizations).
    bytes_per_row = cols * itemsize
    cap_rows = max(_SUBLANE, (block_cap // bytes_per_row) // _SUBLANE * _SUBLANE)
    tr = min(cap_rows, (rows // _SUBLANE) * _SUBLANE)

    # v7x megacore: keep at least two row tiles when the input allows, so both
    # TensorCores get work on the "parallel" axis.
    if pl.cdiv(rows, tr) < 2 and rows >= 2 * _SUBLANE:
        tr = max(_SUBLANE, _round_up(-(-rows // 2), _SUBLANE))

    grid = (pl.cdiv(rows, tr),)
    block_bytes = tr * cols * itemsize
    # Cover in+out double-buffering (4 buffers) plus headroom.
    vmem_limit = min(4 * block_bytes + (4 << 20), 96 << 20)

    x2d = flat.reshape(rows, cols)
    out2d = pl.pallas_call(
        _copy_kernel,
        out_shape=jax.ShapeDtypeStruct((rows, cols), x.dtype),
        grid=grid,
        in_specs=[pl.BlockSpec((tr, cols), lambda i: (i, 0))],
        out_specs=pl.BlockSpec((tr, cols), lambda i: (i, 0)),
        compiler_params=pltpu.CompilerParams(
            dimension_semantics=("parallel",),   # v7x: split row tiles across TCs
            vmem_limit_bytes=vmem_limit,
        ),
        cost_estimate=pl.CostEstimate(
            flops=0, transcendentals=0, bytes_accessed=2 * x.nbytes),
        input_output_aliases=({0: 0} if donate else {}),
    )(x2d)

    out_flat = out2d.reshape(-1)
    if padded_total != total:
        out_flat = out_flat[:total]
    return out_flat.reshape(x.shape)


class Net:
    """JAX/Pallas port of the (empty) PyTorch Net module."""

    def __init__(self):
        # Reference __init__ defines no parameters.
        pass

    def forward(self, x):
        # Reference forward performs no computation and returns None.
        # No Pallas call here — an identity copy would be pure dead work
        # (2x sizeof(x) HBM traffic + dispatch overhead for nothing).
        return None

    __call__ = forward


if __name__ == "__main__":
    key = jax.random.PRNGKey(0)
    # Small NCHW input consistent with a conv-style module: batch=2, channels=4,
    # spatial=16x16.
    x = jax.random.normal(key, (2, 4, 16, 16), dtype=jnp.float32)

    # Exercise the optimized Pallas copy kernel once and block on the result.
    y = pallas_identity(x)
    y = jax.block_until_ready(y)
    assert y.shape == x.shape and y.dtype == x.dtype
    assert bool(jnp.allclose(y, x)), "identity kernel mismatch"

    # Also exercise the padded (non-multiple-of-128 element count) path.
    x_odd = jax.random.normal(jax.random.PRNGKey(1), (3, 5, 7), dtype=jnp.float32)
    y_odd = jax.block_until_ready(pallas_identity(x_odd))
    assert y_odd.shape == x_odd.shape
    assert bool(jnp.allclose(y_odd, x_odd)), "padded identity kernel mismatch"

    # Net.forward matches the PyTorch module exactly: it returns None and does
    # no work.
    net = Net()
    out = net(x)
    assert out is None

    print("KERNEL_OK")
</pallas_src>

<mosaic_0001>
module attributes {stable_mosaic.version = 11 : i64} {
  func.func @_copy_kernel(%arg0: i32, %arg1: memref<8x256xf32, #tpu.memory_space<vmem>>, %arg2: memref<8x256xf32, #tpu.memory_space<vmem>>) attributes {dimension_semantics = [#tpu.dimension_semantics<parallel>], iteration_bounds = array<i64: 1>, scalar_prefetch = 0 : i64, scratch_operands = 0 : i64, tpu.core_type = #tpu.core_type<tc>, window_params = [{transform_indices = @transform_0, window_bounds = array<i64: 8, 256>}, {transform_indices = @transform_1, window_bounds = array<i64: 8, 256>}]} {
    %c0 = arith.constant 0 : index
    %c0_0 = arith.constant 0 : index
    %0 = vector.load %arg1[%c0, %c0_0] : memref<8x256xf32, #tpu.memory_space<vmem>>, vector<8x256xf32>
    %c0_1 = arith.constant 0 : index
    %c0_2 = arith.constant 0 : index
    %1 = vector.load %arg2[%c0_1, %c0_2] : memref<8x256xf32, #tpu.memory_space<vmem>>, vector<8x256xf32>
    tpu.vector_store %arg2[%c0_1, %c0_2], %0 {strides = array<i32>} : memref<8x256xf32, #tpu.memory_space<vmem>>, vector<8x256xf32>,
    return
  }
  func.func @transform_0(%arg0: i32) -> (i32, i32) {
    %c0_i32 = arith.constant 0 : i32
    %c0_i32_0 = arith.constant 0 : i32
    return %arg0, %c0_i32 : i32, i32
  }
  func.func @transform_1(%arg0: i32) -> (i32, i32) {
    %c0_i32 = arith.constant 0 : i32
    %c0_i32_0 = arith.constant 0 : i32
    return %arg0, %c0_i32 : i32, i32
  }
}

</mosaic_0001>

<llo_original>
// kernel: tpu_custom_call.1
$region0: #{tpu_custom_call.1}
  #allocation0 [shape = 'u32[]', space=smem, size = 0x4, offset = 0x4, fixed_abs, tag = 'smem constant byte address 0x4 - core index']
  #allocation1 [shape = 'u32[144,128]{1,0:T(1,128)}', space=vmem, size = 0x12000, scoped, tag = 'internal scratch']
  %s0 = inlined_call_operand.hbm [shape: f32[8,256], index: 0, kind: input, shape index: {}]
  %s1 = inlined_call_operand.hbm [shape: f32[8,256], index: 1, kind: output, shape index: {}]
  %s2 = sld [smem:[#allocation0]]
  $region18: #{tpu_custom_call.1} parent=0
    _
  %s4 = ssub.s32 1, %s2
  %s5 = scalar_select 0, %s4, %s2
  $region1: #{tpu_custom_call.1} parent=0
    #allocation2 [shape = 'u8[8192]{0}', space=vmem, size = 0x2000, scoped, tag = 'input window, operand 0, single buffered']
    #allocation3 [shape = 's32[1]{0}', space=sflag, size = 0x4, scoped, tag = 'scoped memory for tpu_custom_call.1']
    #allocation4 [shape = 's32[1]{0}', space=sflag, size = 0x4, scoped, tag = 'scoped memory for tpu_custom_call.1']
    #allocation5 [shape = 'u8[8192]{0}', space=vmem, size = 0x2000, scoped, tag = 'output window, operand 0, single buffered']
    %6 = vsyncpa [#allocation3], 0
    %7 = vsyncpa [#allocation4], 0
    // Predicated region
    $region2: #{tpu_custom_call.1} parent=1 // pred_check
      _
    $region3: #{tpu_custom_call.1} parent=1 // pred_check_branch
      %9 = sbr.rel (0) target = $region5
    $region4: #{tpu_custom_call.1} parent=1 // pred_region
      %s11 = ssub.s32 256, 256
      %12 = vsyncadd [#allocation3], %s11
      %s14 = sshll.u32 [#allocation2], 4
      %s15 = int_to_ptr.vmem [resolvable:$true] %s14
      %17 = dma.hbm_to_vmem [thread:$0]  %s0, 256, %s15, [#allocation3]
    $region5: #{tpu_custom_call.1} parent=1 // pred_fallthru
      _
    // Predicated region
    $region6: #{tpu_custom_call.1} parent=1 // pred_check
      _
    $region7: #{tpu_custom_call.1} parent=1 // pred_check_branch
      %19 = sbr.rel (0) target = $region9
    $region8: #{tpu_custom_call.1} parent=1 // pred_region
      %20 = dma.done [#allocation3], 256
    $region9: #{tpu_custom_call.1} parent=1 // pred_fallthru
      _
    %v21 = vld [vmem:[#allocation2] sm:$0xff]
    %v22 = vld [vmem:[#allocation2 + $0x8] sm:$0xff]
    %23 = vst [vmem:[#allocation5] sm:$0xff] %v21
    %24 = vst [vmem:[#allocation5 + $0x8] sm:$0xff] %v22
    // Predicated region
    $region10: #{tpu_custom_call.1} parent=1 // pred_check
      _
    $region11: #{tpu_custom_call.1} parent=1 // pred_check_branch
      %26 = sbr.rel (0) target = $region13
    $region12: #{tpu_custom_call.1} parent=1 // pred_region
      %s28 = ssub.s32 256, 256
      %29 = vsyncadd [#allocation4], %s28
      %s31 = sshll.u32 [#allocation5], 4
      %s32 = int_to_ptr.vmem [resolvable:$true] %s31
      %34 = dma.vmem_to_hbm [thread:$0]  %s32, 256, %s1, [#allocation4]
    $region13: #{tpu_custom_call.1} parent=1 // pred_fallthru
      _
    // Predicated region
    $region14: #{tpu_custom_call.1} parent=1 // pred_check
      _
    $region15: #{tpu_custom_call.1} parent=1 // pred_check_branch
      %36 = sbr.rel (0) target = $region17
    $region16: #{tpu_custom_call.1} parent=1 // pred_region
      %37 = dma.done [#allocation4], 256
    $region17: #{tpu_custom_call.1} parent=1 // pred_fallthru
      _
    %38 = vsyncpa [#allocation3], 1
    %39 = vsyncpa [#allocation4], 1

</llo_original>
